<compile_context>
chip_gen: v6e
topology: v6e:2x2x1
jax: 0.10.0
libtpu: 0.0.40
codegen_flags: <defaults>
</compile_context>

<pallas_src>
import jax
import jax.numpy as jnp
from jax.experimental import pallas as pl
from jax.experimental.pallas import tpu as pltpu


def _bottleneck_cs_kernel(x_ref, w1_ref, b1_ref, w2_ref, b2_ref, w3_ref, b3_ref,
                          y_ref, pad_ref):
    B, H, WCin = x_ref.shape
    WC1 = w1_ref.shape[1]
    WC2 = w2_ref.shape[2]
    WCout = w3_ref.shape[1]

    # Lane-dense load; merge leading dims only.
    xf = x_ref[...].reshape(B * H, WCin)                          # bf16

    # ---- conv1 (1x1) + BN1 + ReLU (BN folded into w1/b1; CS1 folded into w2)
    t1 = jnp.dot(xf, w1_ref[...], preferred_element_type=jnp.float32)
    t1 = jnp.maximum(t1 + b1_ref[...], 0.0)                       # (B*H, WC1) f32

    # ---- conv2 (3x3, stride 1, pad 1) + BN2 + ReLU (CS2 folded into w3) ----
    # W-direction shift + zero-pad is encoded in the banded matrices
    # w2_ref[kh]; only the H direction needs a padded scratch.  The two border
    # rows are re-zeroed every step (cheap) so there is no cross-step scratch
    # state -> safe under "parallel" grid semantics.
    zero_row = jnp.zeros((B, 1, WC1), pad_ref.dtype)
    pad_ref[:, 0:1, :] = zero_row
    pad_ref[:, H + 1:H + 2, :] = zero_row
    pad_ref[:, 1:H + 1, :] = t1.reshape(B, H, WC1)

    lhs0 = pad_ref[:, 0:H, :].reshape(B * H, WC1).astype(jnp.bfloat16)
    acc = jnp.dot(lhs0, w2_ref[0], preferred_element_type=jnp.float32)
    for kh in (1, 2):
        lhs = pad_ref[:, kh:kh + H, :].reshape(B * H, WC1).astype(jnp.bfloat16)
        acc = acc + jnp.dot(lhs, w2_ref[kh], preferred_element_type=jnp.float32)
    t2 = jnp.maximum(acc + b2_ref[...], 0.0)                      # (B*H, WC2) f32

    # ---- conv3 (1x1) + BN3 --------------------------------------------------
    t3 = jnp.dot(t2.astype(jnp.bfloat16), w3_ref[...],
                 preferred_element_type=jnp.float32) + b3_ref[...]

    # ---- residual add + final ReLU, lane-dense (W*Cout = 128) store ---------
    y = jnp.maximum(t3 + xf.astype(jnp.float32), 0.0)
    y_ref[...] = y.reshape(B, H, WCout).astype(y_ref.dtype)


def _fold_bn(gamma, beta, mean, var, eps=1e-5):
    scale = gamma / jnp.sqrt(var + eps)
    return scale, beta - mean * scale


def _build_packed_params(w1_oihw, bn1, m1, w2_oihw, bn2, m2, w3_oihw, bn3, W):
    """Fold BN + CS masks into lane-packed (W-blocked) weights, cast to bf16."""
    s1, b1 = bn1
    s2, b2 = bn2
    s3, b3 = bn3
    C1, Cin = w1_oihw.shape[0], w1_oihw.shape[1]
    C2 = w2_oihw.shape[0]
    Cout = w3_oihw.shape[0]

    # conv1: BN1 scale on output channels; block-diagonal over W positions.
    w1m = jnp.transpose(w1_oihw[:, :, 0, 0]) * s1[None, :]          # (Cin, C1)
    w1_blk = jnp.kron(jnp.eye(W, dtype=jnp.float32), w1m)           # (W*Cin, W*C1)
    b1_row = jnp.tile(b1, W).reshape(1, W * C1)

    # conv2: CS mask m1 on input channels, BN2 scale on output channels.
    # Banded (W*C1, W*C2) matrix per kernel row encodes the W shift + zero pad.
    w2hwio = jnp.transpose(w2_oihw, (2, 3, 1, 0))                   # (3,3,C1,C2)
    w2eff = w2hwio * m1[None, None, :, None] * s2[None, None, None, :]
    w2_band = jnp.zeros((3, W * C1, W * C2), jnp.float32)
    for kh in range(3):
        for w_out in range(W):
            for kw in range(3):
                w_in = w_out + kw - 1
                if 0 <= w_in < W:
                    w2_band = w2_band.at[
                        kh,
                        w_in * C1:(w_in + 1) * C1,
                        w_out * C2:(w_out + 1) * C2].set(w2eff[kh, kw])
    b2_row = jnp.tile(b2, W).reshape(1, W * C2)

    # conv3: CS mask m2 on input channels, BN3 scale on output channels.
    w3m = jnp.transpose(w3_oihw[:, :, 0, 0]) * s3[None, :]          # (C2, Cout)
    w3m = w3m * m2[:, None]
    w3_blk = jnp.kron(jnp.eye(W, dtype=jnp.float32), w3m)           # (W*C2, W*Cout)
    b3_row = jnp.tile(b3, W).reshape(1, W * Cout)

    bf = lambda a: a.astype(jnp.bfloat16)
    f32 = lambda a: a.astype(jnp.float32)
    return (bf(w1_blk), f32(b1_row), bf(w2_band), f32(b2_row),
            bf(w3_blk), f32(b3_row))


def bottleneck_cs_forward(x_nchw, w1_oihw, bn1, m1, w2_oihw, bn2, m2,
                          w3_oihw, bn3, *, block_batch=8):
    N, Cin, H, W = x_nchw.shape
    C1 = w1_oihw.shape[0]
    C2 = w2_oihw.shape[0]
    Cout = w3_oihw.shape[0]
    assert Cout == Cin, "residual add needs Cout == Cin (downsample=None)"
    B = min(block_batch, N)
    assert N % B == 0, "batch must be divisible by block_batch"

    w1b, b1r, w2b, b2r, w3b, b3r = _build_packed_params(
        w1_oihw, bn1, m1, w2_oihw, bn2, m2, w3_oihw, bn3, W)

    # NCHW -> lane-dense (N, H, W*Cin) bf16 (free reshape of contiguous NHWC).
    x_lane = jnp.transpose(x_nchw, (0, 2, 3, 1)).reshape(N, H, W * Cin)
    x_lane = x_lane.astype(jnp.bfloat16)

    full = lambda arr: pl.BlockSpec(arr.shape, lambda i, _nd=arr.ndim: (0,) * _nd)

    y_lane = pl.pallas_call(
        _bottleneck_cs_kernel,
        out_shape=jax.ShapeDtypeStruct((N, H, W * Cout), jnp.float32),
        grid_spec=pltpu.PrefetchScalarGridSpec(
            num_scalar_prefetch=0,
            grid=(N // B,),
            in_specs=[
                pl.BlockSpec((B, H, W * Cin), lambda i: (i, 0, 0)),   # x
                full(w1b), full(b1r),                                 # conv1
                full(w2b), full(b2r),                                 # conv2
                full(w3b), full(b3r),                                 # conv3
            ],
            out_specs=pl.BlockSpec((B, H, W * Cout), lambda i: (i, 0, 0)),
            scratch_shapes=[pltpu.VMEM((B, H + 2, W * C1), jnp.float32)],
        ),
        compiler_params=pltpu.CompilerParams(
            dimension_semantics=("parallel",),        # shardable on v7x's 2 TCs
            vmem_limit_bytes=32 * 1024 * 1024,        # size B against v7x VMEM
        ),
    )(x_lane, w1b, b1r, w2b, b2r, w3b, b3r)

    return jnp.transpose(y_lane.reshape(N, H, W, Cout), (0, 3, 1, 2))


def _ref_forward(x_nhwc, w1_oihw, bn1, m1, w2_oihw, bn2, m2, w3_oihw, bn3):
    """Pure-f32 reference with the module's forward semantics (eval mode)."""
    s1, b1 = bn1
    s2, b2 = bn2
    s3, b3 = bn3
    w1m = jnp.transpose(w1_oihw[:, :, 0, 0])
    w3m = jnp.transpose(w3_oihw[:, :, 0, 0])
    w2hwio = jnp.transpose(w2_oihw, (2, 3, 1, 0))
    t = jnp.einsum('nhwc,cd->nhwd', x_nhwc, w1m)
    t = jnp.maximum(t * s1 + b1, 0.0) * m1
    t = jax.lax.conv_general_dilated(
        t, w2hwio, window_strides=(1, 1), padding=((1, 1), (1, 1)),
        dimension_numbers=('NHWC', 'HWIO', 'NHWC'))
    t = jnp.maximum(t * s2 + b2, 0.0) * m2
    t = jnp.einsum('nhwc,cd->nhwd', t, w3m)
    t = t * s3 + b3
    return jnp.maximum(t + x_nhwc, 0.0)


if __name__ == "__main__":
    # Shapes consistent with the module (stride=1, downsample=None, Cout==Cin):
    #   number_list = [C1, Cin, C2, C1, Cout, C2] = [8, 16, 8, 8, 16, 8]
    N, Cin, H, W = 16, 16, 8, 8
    C1, C2, Cout = 8, 8, 16

    key = jax.random.PRNGKey(0)
    ks = jax.random.split(key, 8)

    x_nchw = jax.random.normal(ks[0], (N, Cin, H, W), jnp.float32)

    # Conv weights in PyTorch OIHW layout.
    w1 = jax.random.normal(ks[1], (C1, Cin, 1, 1), jnp.float32) * 0.1
    w2 = jax.random.normal(ks[2], (C2, C1, 3, 3), jnp.float32) * 0.1
    w3 = jax.random.normal(ks[3], (Cout, C2, 1, 1), jnp.float32) * 0.1

    def bn_params(k, c):
        k1, k2, k3, k4 = jax.random.split(k, 4)
        gamma = jax.random.uniform(k1, (c,), jnp.float32, 0.5, 1.5)
        beta = jax.random.normal(k2, (c,), jnp.float32) * 0.1
        mean = jax.random.normal(k3, (c,), jnp.float32) * 0.1
        var = jax.random.uniform(k4, (c,), jnp.float32, 0.5, 1.5)
        return _fold_bn(gamma, beta, mean, var)

    bn1 = bn_params(ks[4], C1)
    bn2 = bn_params(ks[5], C2)
    bn3 = bn_params(ks[6], Cout)

    # MyCS (eval path) modelled as keep-mask from channel_index * scale_factor.
    scale_factor1 = scale_factor2 = 1.0
    channel_index1 = jnp.arange(0, C1, 2)
    channel_index2 = jnp.arange(0, C2, 2)
    m1 = jnp.zeros((C1,), jnp.float32).at[channel_index1].set(1.0) * scale_factor1
    m2 = jnp.zeros((C2,), jnp.float32).at[channel_index2].set(1.0) * scale_factor2

    y = bottleneck_cs_forward(x_nchw, w1, bn1, m1, w2, bn2, m2, w3, bn3,
                              block_batch=8)
    y = jax.block_until_ready(y)

    x_nhwc = jnp.transpose(x_nchw, (0, 2, 3, 1))
    y_ref = jnp.transpose(
        _ref_forward(x_nhwc, w1, bn1, m1, w2, bn2, m2, w3, bn3), (0, 3, 1, 2))

    # bf16 weights/activations in the kernel vs full-f32 reference -> loose tol.
    max_err = float(jnp.max(jnp.abs(y - y_ref)))
    assert jnp.allclose(y, y_ref, rtol=2e-2, atol=2e-2), f"mismatch {max_err}"

    print("KERNEL_OK")
</pallas_src>

<mosaic_0001>
module attributes {stable_mosaic.version = 11 : i64} {
  func.func @_bottleneck_cs_kernel(%arg0: i32, %arg1: memref<8x8x128xbf16, #tpu.memory_space<vmem>>, %arg2: memref<128x64xbf16, #tpu.memory_space<vmem>>, %arg3: memref<1x64xf32, #tpu.memory_space<vmem>>, %arg4: memref<3x64x64xbf16, #tpu.memory_space<vmem>>, %arg5: memref<1x64xf32, #tpu.memory_space<vmem>>, %arg6: memref<64x128xbf16, #tpu.memory_space<vmem>>, %arg7: memref<1x128xf32, #tpu.memory_space<vmem>>, %arg8: memref<8x8x128xf32, #tpu.memory_space<vmem>>, %arg9: memref<8x10x64xf32, #tpu.memory_space<vmem>>) attributes {dimension_semantics = [#tpu.dimension_semantics<parallel>], iteration_bounds = array<i64: 2>, scalar_prefetch = 0 : i64, scratch_operands = 1 : i64, tpu.core_type = #tpu.core_type<tc>, window_params = [{transform_indices = @transform_0, window_bounds = array<i64: 8, 8, 128>}, {pipeline_mode = #tpu.pipeline_mode<synchronous>, transform_indices = @transform_1, window_bounds = array<i64: 128, 64>}, {pipeline_mode = #tpu.pipeline_mode<synchronous>, transform_indices = @transform_2, window_bounds = array<i64: 1, 64>}, {pipeline_mode = #tpu.pipeline_mode<synchronous>, transform_indices = @transform_3, window_bounds = array<i64: 3, 64, 64>}, {pipeline_mode = #tpu.pipeline_mode<synchronous>, transform_indices = @transform_4, window_bounds = array<i64: 1, 64>}, {pipeline_mode = #tpu.pipeline_mode<synchronous>, transform_indices = @transform_5, window_bounds = array<i64: 64, 128>}, {pipeline_mode = #tpu.pipeline_mode<synchronous>, transform_indices = @transform_6, window_bounds = array<i64: 1, 128>}, {transform_indices = @transform_7, window_bounds = array<i64: 8, 8, 128>}]} {
    %c0 = arith.constant 0 : index
    %c0_0 = arith.constant 0 : index
    %c0_1 = arith.constant 0 : index
    %0 = vector.load %arg1[%c0, %c0_0, %c0_1] : memref<8x8x128xbf16, #tpu.memory_space<vmem>>, vector<8x8x128xbf16>
    %1 = vector.shape_cast %0 : vector<8x8x128xbf16> to vector<64x128xbf16>
    %c0_2 = arith.constant 0 : index
    %c0_3 = arith.constant 0 : index
    %2 = vector.load %arg2[%c0_2, %c0_3] : memref<128x64xbf16, #tpu.memory_space<vmem>>, vector<128x64xbf16>
    %cst = arith.constant dense<0.000000e+00> : vector<64x64xf32>
    %3 = tpu.matmul %1, %2, %cst {dimension_numbers = #tpu.dot_dimension_numbers<[1], [0], [0], [1], [0, 0, 1, 1], [], []>} : vector<64x128xbf16>, vector<128x64xbf16>, vector<64x64xf32> -> vector<64x64xf32>
    %c0_4 = arith.constant 0 : index
    %c0_5 = arith.constant 0 : index
    %4 = vector.load %arg3[%c0_4, %c0_5] : memref<1x64xf32, #tpu.memory_space<vmem>>, vector<1x64xf32>
    %5 = vector.broadcast %4 : vector<1x64xf32> to vector<64x64xf32>
    %6 = arith.addf %3, %5 : vector<64x64xf32>
    %cst_6 = arith.constant 0.000000e+00 : f32
    %7 = vector.broadcast %cst_6 : f32 to vector<64x64xf32>
    %8 = arith.maximumf %6, %7 : vector<64x64xf32>
    %cst_7 = arith.constant 0.000000e+00 : f32
    %9 = vector.broadcast %cst_7 : f32 to vector<8x1x64xf32>
    %c0_8 = arith.constant 0 : index
    %c0_9 = arith.constant 0 : index
    %c0_10 = arith.constant 0 : index
    %10 = vector.load %arg9[%c0_8, %c0_9, %c0_10] : memref<8x10x64xf32, #tpu.memory_space<vmem>>, vector<8x1x64xf32>
    tpu.vector_store %arg9[%c0_8, %c0_9, %c0_10], %9 {strides = array<i32>} : memref<8x10x64xf32, #tpu.memory_space<vmem>>, vector<8x1x64xf32>,
    %c0_11 = arith.constant 0 : index
    %c9 = arith.constant 9 : index
    %c0_12 = arith.constant 0 : index
    %11 = vector.load %arg9[%c0_11, %c9, %c0_12] : memref<8x10x64xf32, #tpu.memory_space<vmem>>, vector<8x1x64xf32>
    tpu.vector_store %arg9[%c0_11, %c9, %c0_12], %9 {strides = array<i32>} : memref<8x10x64xf32, #tpu.memory_space<vmem>>, vector<8x1x64xf32>,
    %12 = vector.shape_cast %8 : vector<64x64xf32> to vector<8x8x64xf32>
    %c0_13 = arith.constant 0 : index
    %c1 = arith.constant 1 : index
    %c0_14 = arith.constant 0 : index
    %13 = vector.load %arg9[%c0_13, %c1, %c0_14] : memref<8x10x64xf32, #tpu.memory_space<vmem>>, vector<8x8x64xf32>
    tpu.vector_store %arg9[%c0_13, %c1, %c0_14], %12 {strides = array<i32>} : memref<8x10x64xf32, #tpu.memory_space<vmem>>, vector<8x8x64xf32>,
    %c0_15 = arith.constant 0 : index
    %c0_16 = arith.constant 0 : index
    %c0_17 = arith.constant 0 : index
    %14 = vector.load %arg9[%c0_15, %c0_16, %c0_17] : memref<8x10x64xf32, #tpu.memory_space<vmem>>, vector<8x8x64xf32>
    %15 = vector.shape_cast %14 : vector<8x8x64xf32> to vector<64x64xf32>
    %16 = arith.truncf %15 : vector<64x64xf32> to vector<64x64xbf16>
    %c0_18 = arith.constant 0 : index
    %c0_19 = arith.constant 0 : index
    %c0_20 = arith.constant 0 : index
    %17 = vector.load %arg4[%c0_18, %c0_19, %c0_20] : memref<3x64x64xbf16, #tpu.memory_space<vmem>>, vector<1x64x64xbf16>
    %18 = vector.shape_cast %17 : vector<1x64x64xbf16> to vector<64x64xbf16>
    %cst_21 = arith.constant dense<0.000000e+00> : vector<64x64xf32>
    %19 = tpu.matmul %16, %18, %cst_21 {dimension_numbers = #tpu.dot_dimension_numbers<[1], [0], [0], [1], [0, 0, 1, 1], [], []>} : vector<64x64xbf16>, vector<64x64xbf16>, vector<64x64xf32> -> vector<64x64xf32>
    %c0_22 = arith.constant 0 : index
    %c1_23 = arith.constant 1 : index
    %c0_24 = arith.constant 0 : index
    %20 = vector.load %arg9[%c0_22, %c1_23, %c0_24] : memref<8x10x64xf32, #tpu.memory_space<vmem>>, vector<8x8x64xf32>
    %21 = vector.shape_cast %20 : vector<8x8x64xf32> to vector<64x64xf32>
    %22 = arith.truncf %21 : vector<64x64xf32> to vector<64x64xbf16>
    %c1_25 = arith.constant 1 : index
    %c0_26 = arith.constant 0 : index
    %c0_27 = arith.constant 0 : index
    %23 = vector.load %arg4[%c1_25, %c0_26, %c0_27] : memref<3x64x64xbf16, #tpu.memory_space<vmem>>, vector<1x64x64xbf16>
    %24 = vector.shape_cast %23 : vector<1x64x64xbf16> to vector<64x64xbf16>
    %cst_28 = arith.constant dense<0.000000e+00> : vector<64x64xf32>
    %25 = tpu.matmul %22, %24, %cst_28 {dimension_numbers = #tpu.dot_dimension_numbers<[1], [0], [0], [1], [0, 0, 1, 1], [], []>} : vector<64x64xbf16>, vector<64x64xbf16>, vector<64x64xf32> -> vector<64x64xf32>
    %26 = arith.addf %19, %25 : vector<64x64xf32>
    %c0_29 = arith.constant 0 : index
    %c2 = arith.constant 2 : index
    %c0_30 = arith.constant 0 : index
    %27 = vector.load %arg9[%c0_29, %c2, %c0_30] : memref<8x10x64xf32, #tpu.memory_space<vmem>>, vector<8x8x64xf32>
    %28 = vector.shape_cast %27 : vector<8x8x64xf32> to vector<64x64xf32>
    %29 = arith.truncf %28 : vector<64x64xf32> to vector<64x64xbf16>
    %c2_31 = arith.constant 2 : index
    %c0_32 = arith.constant 0 : index
    %c0_33 = arith.constant 0 : index
    %30 = vector.load %arg4[%c2_31, %c0_32, %c0_33] : memref<3x64x64xbf16, #tpu.memory_space<vmem>>, vector<1x64x64xbf16>
    %31 = vector.shape_cast %30 : vector<1x64x64xbf16> to vector<64x64xbf16>
    %cst_34 = arith.constant dense<0.000000e+00> : vector<64x64xf32>
    %32 = tpu.matmul %29, %31, %cst_34 {dimension_numbers = #tpu.dot_dimension_numbers<[1], [0], [0], [1], [0, 0, 1, 1], [], []>} : vector<64x64xbf16>, vector<64x64xbf16>, vector<64x64xf32> -> vector<64x64xf32>
    %33 = arith.addf %26, %32 : vector<64x64xf32>
    %c0_35 = arith.constant 0 : index
    %c0_36 = arith.constant 0 : index
    %34 = vector.load %arg5[%c0_35, %c0_36] : memref<1x64xf32, #tpu.memory_space<vmem>>, vector<1x64xf32>
    %35 = vector.broadcast %34 : vector<1x64xf32> to vector<64x64xf32>
    %36 = arith.addf %33, %35 : vector<64x64xf32>
    %cst_37 = arith.constant 0.000000e+00 : f32
    %37 = vector.broadcast %cst_37 : f32 to vector<64x64xf32>
    %38 = arith.maximumf %36, %37 : vector<64x64xf32>
    %39 = arith.truncf %38 : vector<64x64xf32> to vector<64x64xbf16>
    %c0_38 = arith.constant 0 : index
    %c0_39 = arith.constant 0 : index
    %40 = vector.load %arg6[%c0_38, %c0_39] : memref<64x128xbf16, #tpu.memory_space<vmem>>, vector<64x128xbf16>
    %cst_40 = arith.constant dense<0.000000e+00> : vector<64x128xf32>
    %41 = tpu.matmul %39, %40, %cst_40 {dimension_numbers = #tpu.dot_dimension_numbers<[1], [0], [0], [1], [0, 0, 1, 1], [], []>} : vector<64x64xbf16>, vector<64x128xbf16>, vector<64x128xf32> -> vector<64x128xf32>
    %c0_41 = arith.constant 0 : index
    %c0_42 = arith.constant 0 : index
    %42 = vector.load %arg7[%c0_41, %c0_42] : memref<1x128xf32, #tpu.memory_space<vmem>>, vector<1x128xf32>
    %43 = vector.broadcast %42 : vector<1x128xf32> to vector<64x128xf32>
    %44 = arith.addf %41, %43 : vector<64x128xf32>
    %45 = arith.extf %1 : vector<64x128xbf16> to vector<64x128xf32>
    %46 = arith.addf %44, %45 : vector<64x128xf32>
    %cst_43 = arith.constant 0.000000e+00 : f32
    %47 = vector.broadcast %cst_43 : f32 to vector<64x128xf32>
    %48 = arith.maximumf %46, %47 : vector<64x128xf32>
    %49 = vector.shape_cast %48 : vector<64x128xf32> to vector<8x8x128xf32>
    %c0_44 = arith.constant 0 : index
    %c0_45 = arith.constant 0 : index
    %c0_46 = arith.constant 0 : index
    %50 = vector.load %arg8[%c0_44, %c0_45, %c0_46] : memref<8x8x128xf32, #tpu.memory_space<vmem>>, vector<8x8x128xf32>
    tpu.vector_store %arg8[%c0_44, %c0_45, %c0_46], %49 {strides = array<i32>} : memref<8x8x128xf32, #tpu.memory_space<vmem>>, vector<8x8x128xf32>,
    return
  }
  func.func @transform_0(%arg0: i32) -> (i32, i32, i32) {
    %c0_i32 = arith.constant 0 : i32
    %c0_i32_0 = arith.constant 0 : i32
    %c0_i32_1 = arith.constant 0 : i32
    return %arg0, %c0_i32, %c0_i32_0 : i32, i32, i32
  }
  func.func @transform_1(%arg0: i32) -> (i32, i32) {
    %c0_i32 = arith.constant 0 : i32
    %c0_i32_0 = arith.constant 0 : i32
    %c0_i32_1 = arith.constant 0 : i32
    return %c0_i32, %c0_i32_0 : i32, i32
  }
  func.func @transform_2(%arg0: i32) -> (i32, i32) {
    %c0_i32 = arith.constant 0 : i32
    %c0_i32_0 = arith.constant 0 : i32
    %c0_i32_1 = arith.constant 0 : i32
    return %c0_i32, %c0_i32_0 : i32, i32
  }
  func.func @transform_3(%arg0: i32) -> (i32, i32, i32) {
    %c0_i32 = arith.constant 0 : i32
    %c0_i32_0 = arith.constant 0 : i32
    %c0_i32_1 = arith.constant 0 : i32
    %c0_i32_2 = arith.constant 0 : i32
    return %c0_i32, %c0_i32_0, %c0_i32_1 : i32, i32, i32
  }
  func.func @transform_4(%arg0: i32) -> (i32, i32) {
    %c0_i32 = arith.constant 0 : i32
    %c0_i32_0 = arith.constant 0 : i32
    %c0_i32_1 = arith.constant 0 : i32
    return %c0_i32, %c0_i32_0 : i32, i32
  }
  func.func @transform_5(%arg0: i32) -> (i32, i32) {
    %c0_i32 = arith.constant 0 : i32
    %c0_i32_0 = arith.constant 0 : i32
    %c0_i32_1 = arith.constant 0 : i32
    return %c0_i32, %c0_i32_0 : i32, i32
  }
  func.func @transform_6(%arg0: i32) -> (i32, i32) {
    %c0_i32 = arith.constant 0 : i32
    %c0_i32_0 = arith.constant 0 : i32
    %c0_i32_1 = arith.constant 0 : i32
    return %c0_i32, %c0_i32_0 : i32, i32
  }
  func.func @transform_7(%arg0: i32) -> (i32, i32, i32) {
    %c0_i32 = arith.constant 0 : i32
    %c0_i32_0 = arith.constant 0 : i32
    %c0_i32_1 = arith.constant 0 : i32
    return %arg0, %c0_i32, %c0_i32_0 : i32, i32, i32
  }
}

</mosaic_0001>

<llo_original>
// kernel: tpu_custom_call.1
$region0: #{tpu_custom_call.1}
  #allocation0 [shape = 'u32[]', space=smem, size = 0x4, offset = 0x4, fixed_abs, tag = 'smem constant byte address 0x4 - core index']
  #allocation1 [shape = 'u32[144,128]{1,0:T(1,128)}', space=vmem, size = 0x12000, scoped, tag = 'internal scratch']
  #allocation2 [shape = 'f32[8,10,64]{2,1,0:T(8,128)}', space=vmem, size = 0x10000, scoped, tag = 'scratch operand']
  %s0 = inlined_call_operand.hbm [shape: bf16[16,8,128], index: 0, kind: input, shape index: {}]
  %s1 = inlined_call_operand.vmem [shape: bf16[128,64], index: 1, kind: input, shape index: {}]
  %s2 = inlined_call_operand.vmem [shape: f32[1,64], index: 2, kind: input, shape index: {}]
  %s3 = inlined_call_operand.vmem [shape: bf16[3,64,64], index: 3, kind: input, shape index: {}]
  %s4 = inlined_call_operand.vmem [shape: f32[1,64], index: 4, kind: input, shape index: {}]
  %s5 = inlined_call_operand.hbm [shape: bf16[64,128], index: 5, kind: input, shape index: {}]
  %s6 = inlined_call_operand.vmem [shape: f32[1,128], index: 6, kind: input, shape index: {}]
  %s7 = inlined_call_operand.hbm [shape: f32[16,8,128], index: 7, kind: output, shape index: {}]
  %s8 = sld [smem:[#allocation0]]
  $region69: #{tpu_custom_call.1} parent=0
    _
  %s10 = ssub.s32 1, %s8
  %s11 = scalar_select 0, %s10, %s8
  $region1: #{tpu_custom_call.1} parent=0
    #allocation3 [shape = 'u8[32768]{0}', space=vmem, size = 0x8000, scoped, tag = 'input window, operand 0']
    #allocation4 [shape = 's32[2]{0}', space=sflag, size = 0x8, scoped, tag = 'scoped memory for tpu_custom_call.1']
    #allocation5 [shape = 's32[2]{0}', space=sflag, size = 0x8, scoped, tag = 'scoped memory for tpu_custom_call.1']
    #allocation6 [shape = 'u8[16384]{0}', space=vmem, size = 0x4000, scoped, tag = 'input window, operand 5, single buffered']
    #allocation7 [shape = 's32[1]{0}', space=sflag, size = 0x4, scoped, tag = 'scoped memory for tpu_custom_call.1']
    #allocation8 [shape = 'u8[65536]{0}', space=vmem, size = 0x10000, scoped, tag = 'output window, operand 0']
    %12 = vsyncpa [#allocation4], 0
    %s13 = scalar_lea.sflag [#allocation4], 1
    %14 = vsyncpa %s13, 0
    %15 = vsyncpa [#allocation7], 0
    %16 = vsyncpa [#allocation5], 0
    %s17 = scalar_lea.sflag [#allocation5], 1
    %18 = vsyncpa %s17, 0
    loop: start=0, step=1, limit=4
    $region2: #{tpu_custom_call.1} parent=1 // loop_pre_header
      _
    $region3: #{tpu_custom_call.1} parent=1 // loop_header
      %s20 = sphi 0, %s24
      %p21 = scmp.ge.s32.totalorder %s20, 4
      %s30 = sphi 0, %s32
      %s33 = sphi 0, %s30
      %s34 = sphi 0, %s33
      %s50 = sphi 0, %s34
      %s54 = sphi 0, %s54
      %s56 = sphi 0, %s54
      %s57 = sphi 0, %s56
      %s71 = sphi 0, %s57
      %s75 = sphi 0, %s75
      %s77 = sphi 0, %s75
      %s78 = sphi 0, %s77
      %s92 = sphi 0, %s78
      %s96 = sphi 0, %s96
      %s98 = sphi 0, %s96
      %s99 = sphi 0, %s98
      %s113 = sphi 0, %s99
      %s117 = sphi 0, %s117
      %s119 = sphi 0, %s117
      %s120 = sphi 0, %s119
      %s134 = sphi 0, %s120
      %s138 = sphi 0, %s138
      %s140 = sphi 0, %s138
      %s141 = sphi 0, %s140
      %s155 = sphi 0, %s141
      %s159 = sphi 0, %s159
      %s161 = sphi 0, %s159
      %s162 = sphi 0, %s161
      %s176 = sphi 0, %s162
      %s182 = sphi 0, %s184
      %s185 = sphi 0, %s182
      %s186 = sphi 0, %s185
      %s202 = sphi 0, %s186
    $region4: #{tpu_custom_call.1} parent=1 // loop_header_branch
      %23 = sbr.rel (%p21) target = $region8
    $region5: #{tpu_custom_call.1} parent=1 // loop_body
      %s25 = ssub.s32 %s20, 1
      %s26 = ssub.s32 %s20, 2
      %s27 = sadd.s32 %s20, 1
      %s28 = ssub.s32 %s20, %s27
      %p29 = scmp.eq.s32.totalorder %s28, 0
      %s31 = sadd.s32 %s30, 1
      %s32 = scalar_select %p29, %s30, %s31
      %p35 = pneg %p29
      %p36 = scmp.eq.s32.totalorder %s20, 1
      %p37 = por %p35, %p36
      %p38 = scmp.ne.s32.totalorder %s30, %s33
      %p39 = scmp.eq.s32.totalorder %s20, 0
      %p40 = por %p38, %p39
      %p41 = scmp.ne.s32.totalorder %s30, %s33
      %p42 = scmp.eq.s32.totalorder %s25, 1
      %p43 = por %p41, %p42
      %p44 = scmp.ne.s32.totalorder %s33, %s34
      %p45 = scmp.eq.s32.totalorder %s25, 0
      %p46 = por %p44, %p45
      %p47 = scmp.ne.s32.totalorder %s33, %s34
      %p48 = scmp.eq.s32.totalorder %s26, 1
      %p49 = por %p47, %p48
      %p51 = scmp.ne.s32.totalorder %s34, %s50
      %p52 = scmp.eq.s32.totalorder %s26, 0
      %p53 = por %p51, %p52
      %s55 = sadd.s32 %s54, 1
      %p58 = scmp.eq.s32.totalorder %s20, 1
      %p59 = scmp.ne.s32.totalorder %s54, %s56
      %p60 = scmp.eq.s32.totalorder %s20, 0
      %p61 = por %p59, %p60
      %p62 = scmp.ne.s32.totalorder %s54, %s56
      %p63 = scmp.eq.s32.totalorder %s25, 1
      %p64 = por %p62, %p63
      %p65 = scmp.ne.s32.totalorder %s56, %s57
      %p66 = scmp.eq.s32.totalorder %s25, 0
      %p67 = por %p65, %p66
      %p68 = scmp.ne.s32.totalorder %s56, %s57
      %p69 = scmp.eq.s32.totalorder %s26, 1
      %p70 = por %p68, %p69
      %p72 = scmp.ne.s32.totalorder %s57, %s71
      %p73 = scmp.eq.s32.totalorder %s26, 0
      %p74 = por %p72, %p73
      %s76 = sadd.s32 %s75, 1
      %p79 = scmp.eq.s32.totalorder %s20, 1
      %p80 = scmp.ne.s32.totalorder %s75, %s77
      %p81 = scmp.eq.s32.totalorder %s20, 0
      %p82 = por %p80, %p81
      %p83 = scmp.ne.s32.totalorder %s75, %s77
      %p84 = scmp.eq.s32.totalorder %s25, 1
      %p85 = por %p83, %p84
      %p86 = scmp.ne.s32.totalorder %s77, %s78
      %p87 = scmp.eq.s32.totalorder %s25, 0
      %p88 = por %p86, %p87
      %p89 = scmp.ne.s32.totalorder %s77, %s78
      %p90 = scmp.eq.s32.totalorder %s26, 1
      %p91 = por %p89, %p90
      %p93 = scmp.ne.s32.totalorder %s78, %s92
      %p94 = scmp.eq.s32.totalorder %s26, 0
      %p95 = por %p93, %p94
      %s97 = sadd.s32 %s96, 1
      %p100 = scmp.eq.s32.totalorder %s20, 1
      %p101 = scmp.ne.s32.totalorder %s96, %s98
      %p102 = scmp.eq.s32.totalorder %s20, 0
      %p103 = por %p101, %p102
      %p104 = scmp.ne.s32.totalorder %s96, %s98
      %p105 = scmp.eq.s32.totalorder %s25, 1
      %p106 = por %p104, %p105
      %p107 = scmp.ne.s32.totalorder %s98, %s99
      %p108 = scmp.eq.s32.totalorder %s25, 0
      %p109 = por %p107, %p108
      %p110 = scmp.ne.s32.totalorder %s98, %s99
      %p111 = scmp.eq.s32.totalorder %s26, 1
      %p112 = por %p110, %p111
      %p114 = scmp.ne.s32.totalorder %s99, %s113
      %p115 = scmp.eq.s32.totalorder %s26, 0
      %p116 = por %p114, %p115
      %s118 = sadd.s32 %s117, 1
      %p121 = scmp.eq.s32.totalorder %s20, 1
      %p122 = scmp.ne.s32.totalorder %s117, %s119
      %p123 = scmp.eq.s32.totalorder %s20, 0
      %p124 = por %p122, %p123
      %p125 = scmp.ne.s32.totalorder %s117, %s119
      %p126 = scmp.eq.s32.totalorder %s25, 1
      %p127 = por %p125, %p126
      %p128 = scmp.ne.s32.totalorder %s119, %s120
      %p129 = scmp.eq.s32.totalorder %s25, 0
      %p130 = por %p128, %p129
      %p131 = scmp.ne.s32.totalorder %s119, %s120
      %p132 = scmp.eq.s32.totalorder %s26, 1
      %p133 = por %p131, %p132
      %p135 = scmp.ne.s32.totalorder %s120, %s134
      %p136 = scmp.eq.s32.totalorder %s26, 0
      %p137 = por %p135, %p136
      %s139 = sadd.s32 %s138, 1
      %p142 = scmp.eq.s32.totalorder %s20, 1
      %p143 = scmp.ne.s32.totalorder %s138, %s140
      %p144 = scmp.eq.s32.totalorder %s20, 0
      %p145 = por %p143, %p144
      %p146 = scmp.ne.s32.totalorder %s138, %s140
      %p147 = scmp.eq.s32.totalorder %s25, 1
      %p148 = por %p146, %p147
      %p149 = scmp.ne.s32.totalorder %s140, %s141
      %p150 = scmp.eq.s32.totalorder %s25, 0
      %p151 = por %p149, %p150
      %p152 = scmp.ne.s32.totalorder %s140, %s141
      %p153 = scmp.eq.s32.totalorder %s26, 1
      %p154 = por %p152, %p153
      %p156 = scmp.ne.s32.totalorder %s141, %s155
      %p157 = scmp.eq.s32.totalorder %s26, 0
      %p158 = por %p156, %p157
      %s160 = sadd.s32 %s159, 1
      %p163 = scmp.eq.s32.totalorder %s20, 1
      %p164 = scmp.ne.s32.totalorder %s159, %s161
      %p165 = scmp.eq.s32.totalorder %s20, 0
      %p166 = por %p164, %p165
      %p167 = scmp.ne.s32.totalorder %s159, %s161
      %p168 = scmp.eq.s32.totalorder %s25, 1
      %p169 = por %p167, %p168
      %p170 = scmp.ne.s32.totalorder %s161, %s162
      %p171 = scmp.eq.s32.totalorder %s25, 0
      %p172 = por %p170, %p171
      %p173 = scmp.ne.s32.totalorder %s161, %s162
      %p174 = scmp.eq.s32.totalorder %s26, 1
      %p175 = por %p173, %p174
      %p177 = scmp.ne.s32.totalorder %s162, %s176
      %p178 = scmp.eq.s32.totalorder %s26, 0
      %p179 = por %p177, %p178
      %s180 = ssub.s32 %s20, %s27
      %p181 = scmp.eq.s32.totalorder %s180, 0
      %s183 = sadd.s32 %s182, 1
      %s184 = scalar_select %p181, %s182, %s183
      %p187 = pneg %p181
      %p188 = scmp.eq.s32.totalorder %s20, 1
      %p189 = por %p187, %p188
      %p190 = scmp.ne.s32.totalorder %s182, %s185
      %p191 = scmp.eq.s32.totalorder %s20, 0
      %p192 = por %p190, %p191
      %p193 = scmp.ne.s32.totalorder %s182, %s185
      %p194 = scmp.eq.s32.totalorder %s25, 1
      %p195 = por %p193, %p194
      %p196 = scmp.ne.s32.totalorder %s185, %s186
      %p197 = scmp.eq.s32.totalorder %s25, 0
      %p198 = por %p196, %p197
      %p199 = scmp.ne.s32.totalorder %s185, %s186
      %p200 = scmp.eq.s32.totalorder %s26, 1
      %p201 = por %p199, %p200
      %p203 = scmp.ne.s32.totalorder %s186, %s202
      %p204 = scmp.eq.s32.totalorder %s26, 0
      %p205 = por %p203, %p204
      %p206 = scmp.le.s32.totalorder 1, %s20
      %p207 = scmp.lt.s32.totalorder %s20, 3
      %p208 = pnand %p206, %p207
      %p209 = pneg %p208
      // Predicated region
      $region9: #{tpu_custom_call.1} parent=5 // pred_check
        _
      $region10: #{tpu_custom_call.1} parent=5 // pred_check_branch
        %211 = sbr.rel (%p208) target = $region12
      $region11: #{tpu_custom_call.1} parent=5 // pred_region
        %s212 = ssub.s32 %s20, 1
        // Predicated region
        $region13: #{tpu_custom_call.1} parent=11 // pred_check
          %p213 = pneg %p67
        $region14: #{tpu_custom_call.1} parent=11 // pred_check_branch
          %215 = sbr.rel (%p213) target = $region16
        $region15: #{tpu_custom_call.1} parent=11 // pred_region
          _
        $region16: #{tpu_custom_call.1} parent=11 // pred_fallthru
          _
        // Predicated region
        $region17: #{tpu_custom_call.1} parent=11 // pred_check
          %p216 = pneg %p88
        $region18: #{tpu_custom_call.1} parent=11 // pred_check_branch
          %218 = sbr.rel (%p216) target = $region20
        $region19: #{tpu_custom_call.1} parent=11 // pred_region
          _
        $region20: #{tpu_custom_call.1} parent=11 // pred_fallthru
          _
        // Predicated region
        $region21: #{tpu_custom_call.1} parent=11 // pred_check
          %p219 = pneg %p109
        $region22: #{tpu_custom_call.1} parent=11 // pred_check_branch
          %221 = sbr.rel (%p219) target = $region24
        $region23: #{tpu_custom_call.1} parent=11 // pred_region
          _
        $region24: #{tpu_custom_call.1} parent=11 // pred_fallthru
          _
        // Predicated region
        $region25: #{tpu_custom_call.1} parent=11 // pred_check
          %p222 = pneg %p130
        $region26: #{tpu_custom_call.1} parent=11 // pred_check_branch
          %224 = sbr.rel (%p222) target = $region28
        $region27: #{tpu_custom_call.1} parent=11 // pred_region
          _
        $region28: #{tpu_custom_call.1} parent=11 // pred_fallthru
          _
        // Predicated region
        $region29: #{tpu_custom_call.1} parent=11 // pred_check
          %p225 = pneg %p151
        $region30: #{tpu_custom_call.1} parent=11 // pred_check_branch
          %227 = sbr.rel (%p225) target = $region32
        $region31: #{tpu_custom_call.1} parent=11 // pred_region
          %s229 = ssub.s32 512, 512
          %230 = vsyncadd [#allocation7], %s229
          %s231 = sshll.u32 [#allocation6], 4
          %s232 = int_to_ptr.vmem [resolvable:$true] %s231
          %237 = dma.hbm_to_vmem [thread:$0]  %s5, 512, %s232, [#allocation7], 64, 64, 4
        $region32: #{tpu_custom_call.1} parent=11 // pred_fallthru
          _
        // Predicated region
        $region33: #{tpu_custom_call.1} parent=11 // pred_check
          %p238 = pneg %p172
        $region34: #{tpu_custom_call.1} parent=11 // pred_check_branch
          %240 = sbr.rel (%p238) target = $region36
        $region35: #{tpu_custom_call.1} parent=11 // pred_region
          _
        $region36: #{tpu_custom_call.1} parent=11 // pred_fallthru
          _
      $region12: #{tpu_custom_call.1} parent=5 // pred_fallthru
        _
      %p241 = scmp.lt.s32.totalorder %s20, 2
      // Predicated region
      $region37: #{tpu_custom_call.1} parent=5 // pred_check
        %p242 = pneg %p241
      $region38: #{tpu_custom_call.1} parent=5 // pred_check_branch
        %244 = sbr.rel (%p242) target = $region40
      $region39: #{tpu_custom_call.1} parent=5 // pred_region
        // Predicated region
        $region41: #{tpu_custom_call.1} parent=39 // pred_check
          %p245 = pneg %p40
        $region42: #{tpu_custom_call.1} parent=39 // pred_check_branch
          %247 = sbr.rel (%p245) target = $region44
        $region43: #{tpu_custom_call.1} parent=39 // pred_region
          %s248 = sand.u32 %s30, 1
          %s249 = scalar_lea.sflag [#allocation4], %s248
          %s250 = sand.u32 %s30, 1
          %s251 = smul.addr %s250, 32
          %s252 = scalar_lea.vmem [#allocation3], %s251
          %s253 = smul.u32 8, %s20
          %s255 = ssub.s32 512, 512
          %256 = vsyncadd %s249, %s255
          %s257 = smul.addr %s253, 64
          %s258 = scalar_lea.hbm %s0, %s257
          %s259 = sshll.u32 %s252, 4
          %s260 = int_to_ptr.vmem [resolvable:$true] %s259
          %265 = dma.hbm_to_vmem [thread:$0]  %s258, 512, %s260, %s249, 64, 64, 4
        $region44: #{tpu_custom_call.1} parent=39 // pred_fallthru
          _
      $region40: #{tpu_custom_call.1} parent=5 // pred_fallthru
        _
      %p266 = scmp.le.s32.totalorder 1, %s20
      %p267 = scmp.lt.s32.totalorder %s20, 3
      %p268 = pnand %p266, %p267
      %p269 = pneg %p268
      // Predicated region
      $region45: #{tpu_custom_call.1} parent=5 // pred_check
        _
      $region46: #{tpu_custom_call.1} parent=5 // pred_check_branch
        %271 = sbr.rel (%p268) target = $region48
      $region47: #{tpu_custom_call.1} parent=5 // pred_region
        %s272 = ssub.s32 %s20, 1
        %s273 = sand.u32 %s33, 1
        %s274 = scalar_lea.sflag [#allocation4], %s273
        %s275 = sand.u32 %s33, 1
        %s276 = smul.addr %s275, 32
        %s277 = scalar_lea.vmem [#allocation3], %s276
        // Predicated region
        $region49: #{tpu_custom_call.1} parent=47 // pred_check
          %p278 = pneg %p46
        $region50: #{tpu_custom_call.1} parent=47 // pred_check_branch
          %280 = sbr.rel (%p278) target = $region52
        $region51: #{tpu_custom_call.1} parent=47 // pred_region
          %281 = dma.done %s274, 512
        $region52: #{tpu_custom_call.1} parent=47 // pred_fallthru
          _
        // Predicated region
        $region53: #{tpu_custom_call.1} parent=47 // pred_check
          %p282 = pneg %p151
        $region54: #{tpu_custom_call.1} parent=47 // pred_check_branch
          %284 = sbr.rel (%p282) target = $region56
        $region55: #{tpu_custom_call.1} parent=47 // pred_region
          %285 = dma.done [#allocation7], 512
        $region56: #{tpu_custom_call.1} parent=47 // pred_fallthru
          _
        %s286 = sand.u32 %s33, 1
        %s287 = scalar_lea.sflag [#allocation4], %s286
        %s288 = sand.u32 %s33, 1
        %s289 = smul.addr %s288, 32
        %s290 = scalar_lea.vmem [#allocation3], %s289
        %p291 = pneg %p46
        %p292 = pneg %p43
        %p293 = pneg %p67
        %p294 = pneg %p64
        %p295 = pneg %p88
        %p296 = pneg %p85
        %p297 = pneg %p109
        %p298 = pneg %p106
        %p299 = pneg %p130
        %p300 = pneg %p127
        %p301 = pneg %p151
        %p302 = pneg %p148
        %p303 = pneg %p172
        %p304 = pneg %p169
        %p305 = pneg %p198
        %p306 = pneg %p195
        %s307 = sand.u32 %s185, 1
        %s308 = scalar_lea.sflag [#allocation5], %s307
        %s309 = sand.u32 %s185, 1
        %s310 = smul.addr %s309, 64
        %s311 = scalar_lea.vmem [#allocation8], %s310
        %s312 = smul.u32 8, %s25
        %s313 = smul.u32 8, %s25
        %v315 = vld [vmem:[%s277] sm:$0xf]
        %v316 = vld [vmem:[%s277 + $0x4] sm:$0xf]
        %v317 = vld [vmem:[%s277 + $0x8] sm:$0xf]
        %v318 = vld [vmem:[%s277 + $0xc] sm:$0xf]
        %v319 = vld [vmem:[%s277 + $0x10] sm:$0xf]
        %v320 = vld [vmem:[%s277 + $0x14] sm:$0xf]
        %v321 = vld [vmem:[%s277 + $0x18] sm:$0xf]
        %v322 = vld [vmem:[%s277 + $0x1c] sm:$0xf]
        %v323 = vld [vmem:[%s1] sm:$0xf]
        %v324 = vld [vmem:[%s1 + $0x4] sm:$0xf]
        %v325 = vld [vmem:[%s1 + $0x8] sm:$0xf]
        %v326 = vld [vmem:[%s1 + $0xc] sm:$0xf]
        %v327 = vld [vmem:[%s1 + $0x10] sm:$0xf]
        %v328 = vld [vmem:[%s1 + $0x14] sm:$0xf]
        %v329 = vld [vmem:[%s1 + $0x18] sm:$0xf]
        %v330 = vld [vmem:[%s1 + $0x1c] sm:$0xf]
        %v331 = vld [vmem:[%s1 + $0x20] sm:$0xf]
        %v332 = vld [vmem:[%s1 + $0x24] sm:$0xf]
        %v333 = vld [vmem:[%s1 + $0x28] sm:$0xf]
        %v334 = vld [vmem:[%s1 + $0x2c] sm:$0xf]
        %v335 = vld [vmem:[%s1 + $0x30] sm:$0xf]
        %v336 = vld [vmem:[%s1 + $0x34] sm:$0xf]
        %v337 = vld [vmem:[%s1 + $0x38] sm:$0xf]
        %v338 = vld [vmem:[%s1 + $0x3c] sm:$0xf]
        %v339 = vld [vmem:[%s2] sm:$0x1]
        %v341 = vlaneseq
        %v342 = vshrl.u32 %v341, 7
        %v343 = vsub.s32 0, %v342
        %v344 = vrot.slane %v339, %v343
        %v354 = vunpack.c.l.b16 %v315
        %v355 = vunpack.c.l.b16 %v316
        %v356 = vunpack.c.l.b16 %v317
        %v357 = vunpack.c.l.b16 %v318
        %v358 = vunpack.c.l.b16 %v319
        %v359 = vunpack.c.l.b16 %v320
        %v360 = vunpack.c.l.b16 %v321
        %v361 = vunpack.c.l.b16 %v322
        %v362 = vpack.c.b16 %v355, %v354
        %v363 = vpack.c.b16 %v357, %v356
        %v364 = vpack.c.b16 %v359, %v358
        %v365 = vpack.c.b16 %v361, %v360
        %v386 = vunpack.c.l.b16 %v323
        %v387 = vunpack.c.l.b16 %v324
        %v388 = vunpack.c.l.b16 %v325
        %v389 = vunpack.c.l.b16 %v326
        %v390 = vunpack.c.l.b16 %v327
        %v391 = vunpack.c.l.b16 %v328
        %v392 = vunpack.c.l.b16 %v329
        %v393 = vunpack.c.l.b16 %v330
        %v394 = vunpack.c.l.b16 %v331
        %v395 = vunpack.c.l.b16 %v332
        %v396 = vunpack.c.l.b16 %v333
        %v397 = vunpack.c.l.b16 %v334
        %v398 = vunpack.c.l.b16 %v335
        %v399 = vunpack.c.l.b16 %v336
        %v400 = vunpack.c.l.b16 %v337
        %v401 = vunpack.c.l.b16 %v338
        %v402 = vpack.c.b16 %v387, %v386
        %v403 = vpack.c.b16 %v389, %v388
        %v404 = vpack.c.b16 %v391, %v390
        %v405 = vpack.c.b16 %v393, %v392
        %v406 = vpack.c.b16 %v395, %v394
        %v407 = vpack.c.b16 %v397, %v396
        %v408 = vpack.c.b16 %v399, %v398
        %v409 = vpack.c.b16 %v401, %v400
        %418 = vmatprep.subr.bf16.mxu0 0
        %419 = vmatpush1.bf16.msra.mxu0 %v409
        %420 = vmatprep.subr.bf16.mxu0 0
        %421 = vmatpush1.bf16.msra.mxu0 %v408
        %422 = vmatprep.subr.bf16.mxu0 0
        %423 = vmatpush1.bf16.msra.mxu0 %v407
        %424 = vmatprep.subr.bf16.mxu0 0
        %425 = vmatpush1.bf16.msra.mxu0 %v406
        %426 = vmatprep.subr.bf16.mxu0 0
        %427 = vmatpush1.bf16.msra.mxu0 %v405
        %428 = vmatprep.subr.bf16.mxu0 0
        %429 = vmatpush1.bf16.msra.mxu0 %v404
        %430 = vmatprep.subr.bf16.mxu0 0
        %431 = vmatpush1.bf16.msra.mxu0 %v403
        %432 = vmatprep.subr.bf16.mxu0 0
        %433 = vmatpush1.bf16.msra.mxu0 %v402
        %434 = vmatprep.subr.bf16.mxu0 0
        %435 = vmatpush2.bf16.msra.mxu0 0
        %436 = vmatprep.subr.bf16.mxu0 0
        %437 = vmatpush2.bf16.msra.mxu0 0
        %438 = vmatprep.subr.bf16.mxu0 0
        %439 = vmatpush2.bf16.msra.mxu0 0
        %440 = vmatprep.subr.bf16.mxu0 0
        %441 = vmatpush2.bf16.msra.mxu0 0
        %442 = vmatprep.subr.bf16.mxu0 0
        %443 = vmatpush2.bf16.msra.mxu0 0
        %444 = vmatprep.subr.bf16.mxu0 0
        %445 = vmatpush2.bf16.msra.mxu0 0
        %446 = vmatprep.subr.bf16.mxu0 0
        %447 = vmatpush2.bf16.msra.mxu0 0
        %448 = vmatprep.subr.bf16.mxu0 0
        %449 = vmatpush2.bf16.msra.mxu0 0
        %450 = vmatprep.mubr.bf16.mxu0 0
        %451 = vmatmul.mubr.bf16.gmra.mxu0 %v362
        %v452 = vpop.f32.mrf.mxu0
        %v453 = vadd.f32 %v344, %v452
        %v454 = vpop.f32.mrf.mxu0
        %v455 = vpop.f32.mrf.mxu0
        %v456 = vadd.f32 %v344, %v455
        %v457 = vpop.f32.mrf.mxu0
        %458 = vmatprep.mubr.bf16.mxu0 0
        %459 = vmatmul.mubr.bf16.gmra.mxu0 %v363
        %v460 = vpop.f32.mrf.mxu0
        %v461 = vadd.f32 %v344, %v460
        %v462 = vpop.f32.mrf.mxu0
        %v463 = vpop.f32.mrf.mxu0
        %v464 = vadd.f32 %v344, %v463
        %v465 = vpop.f32.mrf.mxu0
        %466 = vmatprep.mubr.bf16.mxu0 0
        %467 = vmatmul.mubr.bf16.gmra.mxu0 %v364
        %v468 = vpop.f32.mrf.mxu0
        %v469 = vadd.f32 %v344, %v468
        %v470 = vpop.f32.mrf.mxu0
        %v471 = vpop.f32.mrf.mxu0
        %v472 = vadd.f32 %v344, %v471
        %v473 = vpop.f32.mrf.mxu0
        %474 = vmatprep.mubr.bf16.mxu0 0
        %475 = vmatmul.mubr.bf16.gmra.mxu0 %v365
        %v476 = vpop.f32.mrf.mxu0
        %v477 = vadd.f32 %v344, %v476
        %v478 = vpop.f32.mrf.mxu0
        %v479 = vpop.f32.mrf.mxu0
        %v480 = vadd.f32 %v344, %v479
        %v481 = vpop.f32.mrf.mxu0
        %482 = vdwg.mxu0
        %v483 = vmax.f32 %v453, 0.0
        %v484 = vmax.f32 %v456, 0.0
        %v485 = vmax.f32 %v461, 0.0
        %v486 = vmax.f32 %v464, 0.0
        %v487 = vmax.f32 %v469, 0.0
        %v488 = vmax.f32 %v472, 0.0
        %v489 = vmax.f32 %v477, 0.0
        %v490 = vmax.f32 %v480, 0.0
        %vm491 = vcmask 516096
        %492 = vst.msk [vmem:[#allocation2] sm:$0x1] %vm491, 0.0
        %493 = vst.msk [vmem:[#allocation2 + $0x10] sm:$0x1] %vm491, 0.0
        %494 = vst.msk [vmem:[#allocation2 + $0x20] sm:$0x1] %vm491, 0.0
        %495 = vst.msk [vmem:[#allocation2 + $0x30] sm:$0x1] %vm491, 0.0
        %496 = vst.msk [vmem:[#allocation2 + $0x40] sm:$0x1] %vm491, 0.0
        %497 = vst.msk [vmem:[#allocation2 + $0x50] sm:$0x1] %vm491, 0.0
        %498 = vst.msk [vmem:[#allocation2 + $0x60] sm:$0x1] %vm491, 0.0
        %499 = vst.msk [vmem:[#allocation2 + $0x70] sm:$0x1] %vm491, 0.0
        %500 = vst.msk [vmem:[#allocation2 + $0x9] sm:$0x1] %vm491, 0.0
        %501 = vst.msk [vmem:[#allocation2 + $0x19] sm:$0x1] %vm491, 0.0
        %502 = vst.msk [vmem:[#allocation2 + $0x29] sm:$0x1] %vm491, 0.0
        %503 = vst.msk [vmem:[#allocation2 + $0x39] sm:$0x1] %vm491, 0.0
        %504 = vst.msk [vmem:[#allocation2 + $0x49] sm:$0x1] %vm491, 0.0
        %505 = vst.msk [vmem:[#allocation2 + $0x59] sm:$0x1] %vm491, 0.0
        %506 = vst.msk [vmem:[#allocation2 + $0x69] sm:$0x1] %vm491, 0.0
        %507 = vst.msk [vmem:[#allocation2 + $0x79] sm:$0x1] %vm491, 0.0
        %vm508 = vcmask 523264
        %509 = vst.msk [vmem:[#allocation2 + $0x1] sm:$0xff] %vm508, %v483
        %510 = vst.msk [vmem:[#allocation2 + $0x11] sm:$0xff] %vm508, %v484
        %511 = vst.msk [vmem:[#allocation2 + $0x21] sm:$0xff] %vm508, %v485
        %512 = vst.msk [vmem:[#allocation2 + $0x31] sm:$0xff] %vm508, %v486
        %513 = vst.msk [vmem:[#allocation2 + $0x41] sm:$0xff] %vm508, %v487
        %514 = vst.msk [vmem:[#allocation2 + $0x51] sm:$0xff] %vm508, %v488
        %515 = vst.msk [vmem:[#allocation2 + $0x61] sm:$0xff] %vm508, %v489
        %516 = vst.msk [vmem:[#allocation2 + $0x71] sm:$0xff] %vm508, %v490
        %v517 = vld [vmem:[#allocation2] sm:$0xff]
        %v518 = vld [vmem:[#allocation2 + $0x10] sm:$0xff]
        %v519 = vld [vmem:[#allocation2 + $0x20] sm:$0xff]
        %v520 = vld [vmem:[#allocation2 + $0x30] sm:$0xff]
        %v521 = vld [vmem:[#allocation2 + $0x40] sm:$0xff]
        %v522 = vld [vmem:[#allocation2 + $0x50] sm:$0xff]
        %v523 = vld [vmem:[#allocation2 + $0x60] sm:$0xff]
        %v524 = vld [vmem:[#allocation2 + $0x70] sm:$0xff]
        %v525 = vpack.c.bf16 %v518, %v517
        %v526 = vpack.c.bf16 %v520, %v519
        %v527 = vpack.c.bf16 %v522, %v521
        %v528 = vpack.c.bf16 %v524, %v523
        %v529 = vld [vmem:[%s3] sm:$0xf]
        %v530 = vld [vmem:[%s3 + $0x4] sm:$0xf]
        %v531 = vld [vmem:[%s3 + $0x8] sm:$0xf]
        %v532 = vld [vmem:[%s3 + $0xc] sm:$0xf]
        %v533 = vld [vmem:[%s3 + $0x10] sm:$0xf]
        %v534 = vld [vmem:[%s3 + $0x14] sm:$0xf]
        %v535 = vld [vmem:[%s3 + $0x18] sm:$0xf]
        %v536 = vld [vmem:[%s3 + $0x1c] sm:$0xf]
        %v537 = vld [vmem:[#allocation2 + $0x1] sm:$0xff]
        %v538 = vld [vmem:[#allocation2 + $0x11] sm:$0xff]
        %v539 = vld [vmem:[#allocation2 + $0x21] sm:$0xff]
        %v540 = vld [vmem:[#allocation2 + $0x31] sm:$0xff]
        %v541 = vld [vmem:[#allocation2 + $0x41] sm:$0xff]
        %v542 = vld [vmem:[#allocation2 + $0x51] sm:$0xff]
        %v543 = vld [vmem:[#allocation2 + $0x61] sm:$0xff]
        %v544 = vld [vmem:[#allocation2 + $0x71] sm:$0xff]
        %v545 = vpack.c.bf16 %v538, %v537
        %v546 = vpack.c.bf16 %v540, %v539
        %v547 = vpack.c.bf16 %v542, %v541
        %v548 = vpack.c.bf16 %v544, %v543
        %s549 = scalar_lea.vmem %s3, 32
        %v550 = vld [vmem:[%s549] sm:$0xf]
        %v551 = vld [vmem:[%s549 + $0x4] sm:$0xf]
        %v552 = vld [vmem:[%s549 + $0x8] sm:$0xf]
        %v553 = vld [vmem:[%s549 + $0xc] sm:$0xf]
        %v554 = vld [vmem:[%s549 + $0x10] sm:$0xf]
        %v555 = vld [vmem:[%s549 + $0x14] sm:$0xf]
        %v556 = vld [vmem:[%s549 + $0x18] sm:$0xf]
        %v557 = vld [vmem:[%s549 + $0x1c] sm:$0xf]
        %v566 = vunpack.c.l.b16 %v550
        %v567 = vunpack.c.l.b16 %v551
        %v568 = vunpack.c.l.b16 %v552
        %v569 = vunpack.c.l.b16 %v553
        %v570 = vunpack.c.l.b16 %v554
        %v571 = vunpack.c.l.b16 %v555
        %v572 = vunpack.c.l.b16 %v556
        %v573 = vunpack.c.l.b16 %v557
        %v574 = vpack.c.b16 %v567, %v566
        %v575 = vpack.c.b16 %v569, %v568
        %v576 = vpack.c.b16 %v571, %v570
        %v577 = vpack.c.b16 %v573, %v572
        %v583 = vsel %vm508, %v545, 0
        %v586 = vsel %vm508, %v546, 0
        %v589 = vsel %vm508, %v547, 0
        %v592 = vsel %vm508, %v548, 0
        %594 = vmatprep.subr.bf16.mxu0 0
        %595 = vmatpush1.bf16.msra.mxu0 0
        %596 = vmatprep.subr.bf16.mxu0 0
        %597 = vmatpush1.bf16.msra.mxu0 0
        %598 = vmatprep.subr.bf16.mxu0 0
        %599 = vmatpush1.bf16.msra.mxu0 0
        %600 = vmatprep.subr.bf16.mxu0 0
        %601 = vmatpush1.bf16.msra.mxu0 0
        %602 = vmatprep.subr.bf16.mxu0 0
        %603 = vmatpush1.bf16.msra.mxu0 %v577
        %604 = vmatprep.subr.bf16.mxu0 0
        %605 = vmatpush1.bf16.msra.mxu0 %v576
        %606 = vmatprep.subr.bf16.mxu0 0
        %607 = vmatpush1.bf16.msra.mxu0 %v575
        %608 = vmatprep.subr.bf16.mxu0 0
        %609 = vmatpush1.bf16.msra.mxu0 %v574
        %610 = vmatprep.subr.bf16.mxu0 0
        %611 = vmatpush2.bf16.msra.mxu0 0
        %612 = vmatprep.subr.bf16.mxu0 0
        %613 = vmatpush2.bf16.msra.mxu0 0
        %614 = vmatprep.subr.bf16.mxu0 0
        %615 = vmatpush2.bf16.msra.mxu0 0
        %616 = vmatprep.subr.bf16.mxu0 0
        %617 = vmatpush2.bf16.msra.mxu0 0
        %618 = vmatprep.subr.bf16.mxu0 0
        %619 = vmatpush2.bf16.msra.mxu0 0
        %620 = vmatprep.subr.bf16.mxu0 0
        %621 = vmatpush2.bf16.msra.mxu0 0
        %622 = vmatprep.subr.bf16.mxu0 0
        %623 = vmatpush2.bf16.msra.mxu0 0
        %624 = vmatprep.subr.bf16.mxu0 0
        %625 = vmatpush2.bf16.msra.mxu0 0
        %626 = vmatprep.mubr.bf16.mxu0 0
        %627 = vmatmul.mubr.bf16.gmra.mxu0 %v583
        %v628 = vpop.f32.mrf.mxu0
        %v629 = vadd.f32 0.0, %v628
        %v630 = vpop.f32.mrf.mxu0
        %v631 = vpop.f32.mrf.mxu0
        %v632 = vadd.f32 0.0, %v631
        %v633 = vpop.f32.mrf.mxu0
        %634 = vmatprep.mubr.bf16.mxu0 0
        %635 = vmatmul.mubr.bf16.gmra.mxu0 %v586
        %v636 = vpop.f32.mrf.mxu0
        %v637 = vadd.f32 0.0, %v636
        %v638 = vpop.f32.mrf.mxu0
        %v639 = vpop.f32.mrf.mxu0
        %v640 = vadd.f32 0.0, %v639
        %v641 = vpop.f32.mrf.mxu0
        %642 = vmatprep.mubr.bf16.mxu0 0
        %643 = vmatmul.mubr.bf16.gmra.mxu0 %v589
        %v644 = vpop.f32.mrf.mxu0
        %v645 = vadd.f32 0.0, %v644
        %v646 = vpop.f32.mrf.mxu0
        %v647 = vpop.f32.mrf.mxu0
        %v648 = vadd.f32 0.0, %v647
        %v649 = vpop.f32.mrf.mxu0
        %650 = vmatprep.mubr.bf16.mxu0 0
        %651 = vmatmul.mubr.bf16.gmra.mxu0 %v592
        %v652 = vpop.f32.mrf.mxu0
        %v653 = vadd.f32 0.0, %v652
        %v654 = vpop.f32.mrf.mxu0
        %v655 = vpop.f32.mrf.mxu0
        %v656 = vadd.f32 0.0, %v655
        %v657 = vpop.f32.mrf.mxu0
        %658 = vdwg.mxu0
        %v667 = vunpack.c.l.b16 %v529
        %v668 = vunpack.c.l.b16 %v530
        %v669 = vunpack.c.l.b16 %v531
        %v670 = vunpack.c.l.b16 %v532
        %v671 = vunpack.c.l.b16 %v533
        %v672 = vunpack.c.l.b16 %v534
        %v673 = vunpack.c.l.b16 %v535
        %v674 = vunpack.c.l.b16 %v536
        %v675 = vpack.c.b16 %v668, %v667
        %v676 = vpack.c.b16 %v670, %v669
        %v677 = vpack.c.b16 %v672, %v671
        %v678 = vpack.c.b16 %v674, %v673
        %v684 = vsel %vm508, %v525, 0
        %v687 = vsel %vm508, %v526, 0
        %v690 = vsel %vm508, %v527, 0
        %v693 = vsel %vm508, %v528, 0
        %695 = vmatprep.subr.bf16.mxu0 0
        %696 = vmatpush1.bf16.msra.mxu0 0
        %697 = vmatprep.subr.bf16.mxu0 0
        %698 = vmatpush1.bf16.msra.mxu0 0
        %699 = vmatprep.subr.bf16.mxu0 0
        %700 = vmatpush1.bf16.msra.mxu0 0
        %701 = vmatprep.subr.bf16.mxu0 0
        %702 = vmatpush1.bf16.msra.mxu0 0
        %703 = vmatprep.subr.bf16.mxu0 0
        %704 = vmatpush1.bf16.msra.mxu0 %v678
        %705 = vmatprep.subr.bf16.mxu0 0
        %706 = vmatpush1.bf16.msra.mxu0 %v677
        %707 = vmatprep.subr.bf16.mxu0 0
        %708 = vmatpush1.bf16.msra.mxu0 %v676
        %709 = vmatprep.subr.bf16.mxu0 0
        %710 = vmatpush1.bf16.msra.mxu0 %v675
        %711 = vmatprep.subr.bf16.mxu0 0
        %712 = vmatpush2.bf16.msra.mxu0 0
        %713 = vmatprep.subr.bf16.mxu0 0
        %714 = vmatpush2.bf16.msra.mxu0 0
        %715 = vmatprep.subr.bf16.mxu0 0
        %716 = vmatpush2.bf16.msra.mxu0 0
        %717 = vmatprep.subr.bf16.mxu0 0
        %718 = vmatpush2.bf16.msra.mxu0 0
        %719 = vmatprep.subr.bf16.mxu0 0
        %720 = vmatpush2.bf16.msra.mxu0 0
        %721 = vmatprep.subr.bf16.mxu0 0
        %722 = vmatpush2.bf16.msra.mxu0 0
        %723 = vmatprep.subr.bf16.mxu0 0
        %724 = vmatpush2.bf16.msra.mxu0 0
        %725 = vmatprep.subr.bf16.mxu0 0
        %726 = vmatpush2.bf16.msra.mxu0 0
        %727 = vmatprep.mubr.bf16.mxu0 0
        %728 = vmatmul.mubr.bf16.gmra.mxu0 %v684
        %v729 = vpop.f32.mrf.mxu0
        %v730 = vadd.f32 %v629, %v729
        %v731 = vpop.f32.mrf.mxu0
        %v732 = vpop.f32.mrf.mxu0
        %v733 = vadd.f32 %v632, %v732
        %v734 = vpop.f32.mrf.mxu0
        %735 = vmatprep.mubr.bf16.mxu0 0
        %736 = vmatmul.mubr.bf16.gmra.mxu0 %v687
        %v737 = vpop.f32.mrf.mxu0
        %v738 = vadd.f32 %v637, %v737
        %v739 = vpop.f32.mrf.mxu0
        %v740 = vpop.f32.mrf.mxu0
        %v741 = vadd.f32 %v640, %v740
        %v742 = vpop.f32.mrf.mxu0
        %743 = vmatprep.mubr.bf16.mxu0 0
        %744 = vmatmul.mubr.bf16.gmra.mxu0 %v690
        %v745 = vpop.f32.mrf.mxu0
        %v746 = vadd.f32 %v645, %v745
        %v747 = vpop.f32.mrf.mxu0
        %v748 = vpop.f32.mrf.mxu0
        %v749 = vadd.f32 %v648, %v748
        %v750 = vpop.f32.mrf.mxu0
        %751 = vmatprep.mubr.bf16.mxu0 0
        %752 = vmatmul.mubr.bf16.gmra.mxu0 %v693
        %v753 = vpop.f32.mrf.mxu0
        %v754 = vadd.f32 %v653, %v753
        %v755 = vpop.f32.mrf.mxu0
        %v756 = vpop.f32.mrf.mxu0
        %v757 = vadd.f32 %v656, %v756
        %v758 = vpop.f32.mrf.mxu0
        %759 = vdwg.mxu0
        %v760 = vld [vmem:[#allocation2 + $0x2] sm:$0xff]
        %v761 = vld [vmem:[#allocation2 + $0x12] sm:$0xff]
        %v762 = vld [vmem:[#allocation2 + $0x22] sm:$0xff]
        %v763 = vld [vmem:[#allocation2 + $0x32] sm:$0xff]
        %v764 = vld [vmem:[#allocation2 + $0x42] sm:$0xff]
        %v765 = vld [vmem:[#allocation2 + $0x52] sm:$0xff]
        %v766 = vld [vmem:[#allocation2 + $0x62] sm:$0xff]
        %v767 = vld [vmem:[#allocation2 + $0x72] sm:$0xff]
        %v768 = vpack.c.bf16 %v761, %v760
        %v769 = vpack.c.bf16 %v763, %v762
        %v770 = vpack.c.bf16 %v765, %v764
        %v771 = vpack.c.bf16 %v767, %v766
        %s772 = scalar_lea.vmem %s3, 64
        %v773 = vld [vmem:[%s772] sm:$0xf]
        %v774 = vld [vmem:[%s772 + $0x4] sm:$0xf]
        %v775 = vld [vmem:[%s772 + $0x8] sm:$0xf]
        %v776 = vld [vmem:[%s772 + $0xc] sm:$0xf]
        %v777 = vld [vmem:[%s772 + $0x10] sm:$0xf]
        %v778 = vld [vmem:[%s772 + $0x14] sm:$0xf]
        %v779 = vld [vmem:[%s772 + $0x18] sm:$0xf]
        %v780 = vld [vmem:[%s772 + $0x1c] sm:$0xf]
        %v789 = vunpack.c.l.b16 %v773
        %v790 = vunpack.c.l.b16 %v774
        %v791 = vunpack.c.l.b16 %v775
        %v792 = vunpack.c.l.b16 %v776
        %v793 = vunpack.c.l.b16 %v777
        %v794 = vunpack.c.l.b16 %v778
        %v795 = vunpack.c.l.b16 %v779
        %v796 = vunpack.c.l.b16 %v780
        %v797 = vpack.c.b16 %v790, %v789
        %v798 = vpack.c.b16 %v792, %v791
        %v799 = vpack.c.b16 %v794, %v793
        %v800 = vpack.c.b16 %v796, %v795
        %v806 = vsel %vm508, %v768, 0
        %v809 = vsel %vm508, %v769, 0
        %v812 = vsel %vm508, %v770, 0
        %v815 = vsel %vm508, %v771, 0
        %817 = vmatprep.subr.bf16.mxu0 0
        %818 = vmatpush1.bf16.msra.mxu0 0
        %819 = vmatprep.subr.bf16.mxu0 0
        %820 = vmatpush1.bf16.msra.mxu0 0
        %821 = vmatprep.subr.bf16.mxu0 0
        %822 = vmatpush1.bf16.msra.mxu0 0
        %823 = vmatprep.subr.bf16.mxu0 0
        %824 = vmatpush1.bf16.msra.mxu0 0
        %825 = vmatprep.subr.bf16.mxu0 0
        %826 = vmatpush1.bf16.msra.mxu0 %v800
        %827 = vmatprep.subr.bf16.mxu0 0
        %828 = vmatpush1.bf16.msra.mxu0 %v799
        %829 = vmatprep.subr.bf16.mxu0 0
        %830 = vmatpush1.bf16.msra.mxu0 %v798
        %831 = vmatprep.subr.bf16.mxu0 0
        %832 = vmatpush1.bf16.msra.mxu0 %v797
        %833 = vmatprep.subr.bf16.mxu0 0
        %834 = vmatpush2.bf16.msra.mxu0 0
        %835 = vmatprep.subr.bf16.mxu0 0
        %836 = vmatpush2.bf16.msra.mxu0 0
        %837 = vmatprep.subr.bf16.mxu0 0
        %838 = vmatpush2.bf16.msra.mxu0 0
        %839 = vmatprep.subr.bf16.mxu0 0
        %840 = vmatpush2.bf16.msra.mxu0 0
        %841 = vmatprep.subr.bf16.mxu0 0
        %842 = vmatpush2.bf16.msra.mxu0 0
        %843 = vmatprep.subr.bf16.mxu0 0
        %844 = vmatpush2.bf16.msra.mxu0 0
        %845 = vmatprep.subr.bf16.mxu0 0
        %846 = vmatpush2.bf16.msra.mxu0 0
        %847 = vmatprep.subr.bf16.mxu0 0
        %848 = vmatpush2.bf16.msra.mxu0 0
        %849 = vmatprep.mubr.bf16.mxu0 0
        %850 = vmatmul.mubr.bf16.gmra.mxu0 %v806
        %v851 = vpop.f32.mrf.mxu0
        %v852 = vadd.f32 0.0, %v851
        %v853 = vpop.f32.mrf.mxu0
        %v854 = vpop.f32.mrf.mxu0
        %v855 = vadd.f32 0.0, %v854
        %v856 = vpop.f32.mrf.mxu0
        %857 = vmatprep.mubr.bf16.mxu0 0
        %858 = vmatmul.mubr.bf16.gmra.mxu0 %v809
        %v859 = vpop.f32.mrf.mxu0
        %v860 = vadd.f32 0.0, %v859
        %v861 = vpop.f32.mrf.mxu0
        %v862 = vpop.f32.mrf.mxu0
        %v863 = vadd.f32 0.0, %v862
        %v864 = vpop.f32.mrf.mxu0
        %865 = vmatprep.mubr.bf16.mxu0 0
        %866 = vmatmul.mubr.bf16.gmra.mxu0 %v812
        %v867 = vpop.f32.mrf.mxu0
        %v868 = vadd.f32 0.0, %v867
        %v869 = vpop.f32.mrf.mxu0
        %v870 = vpop.f32.mrf.mxu0
        %v871 = vadd.f32 0.0, %v870
        %v872 = vpop.f32.mrf.mxu0
        %873 = vmatprep.mubr.bf16.mxu0 0
        %874 = vmatmul.mubr.bf16.gmra.mxu0 %v815
        %v875 = vpop.f32.mrf.mxu0
        %v876 = vadd.f32 0.0, %v875
        %v877 = vpop.f32.mrf.mxu0
        %v878 = vpop.f32.mrf.mxu0
        %v879 = vadd.f32 0.0, %v878
        %v880 = vpop.f32.mrf.mxu0
        %881 = vdwg.mxu0
        %v882 = vadd.f32 %v730, %v852
        %v883 = vadd.f32 %v733, %v855
        %v884 = vadd.f32 %v738, %v860
        %v885 = vadd.f32 %v741, %v863
        %v886 = vadd.f32 %v746, %v868
        %v887 = vadd.f32 %v749, %v871
        %v888 = vadd.f32 %v754, %v876
        %v889 = vadd.f32 %v757, %v879
        %v890 = vld [vmem:[%s4] sm:$0x1]
        %v892 = vlaneseq
        %v893 = vshrl.u32 %v892, 7
        %v894 = vsub.s32 0, %v893
        %v895 = vrot.slane %v890, %v894
        %v897 = vadd.f32 %v882, %v895
        %v898 = vadd.f32 %v883, %v895
        %v899 = vadd.f32 %v884, %v895
        %v900 = vadd.f32 %v885, %v895
        %v901 = vadd.f32 %v886, %v895
        %v902 = vadd.f32 %v887, %v895
        %v903 = vadd.f32 %v888, %v895
        %v904 = vadd.f32 %v889, %v895
        %v905 = vmax.f32 %v897, 0.0
        %v906 = vmax.f32 %v898, 0.0
        %v907 = vmax.f32 %v899, 0.0
        %v908 = vmax.f32 %v900, 0.0
        %v909 = vmax.f32 %v901, 0.0
        %v910 = vmax.f32 %v902, 0.0
        %v911 = vmax.f32 %v903, 0.0
        %v912 = vmax.f32 %v904, 0.0
        %v913 = vpack.c.bf16 %v906, %v905
        %v914 = vpack.c.bf16 %v908, %v907
        %v915 = vpack.c.bf16 %v910, %v909
        %v916 = vpack.c.bf16 %v912, %v911
        %v917 = vld [vmem:[#allocation6] sm:$0xf]
        %v918 = vld [vmem:[#allocation6 + $0x4] sm:$0xf]
        %v919 = vld [vmem:[#allocation6 + $0x8] sm:$0xf]
        %v920 = vld [vmem:[#allocation6 + $0xc] sm:$0xf]
        %v921 = vld [vmem:[#allocation6 + $0x10] sm:$0xf]
        %v922 = vld [vmem:[#allocation6 + $0x14] sm:$0xf]
        %v923 = vld [vmem:[#allocation6 + $0x18] sm:$0xf]
        %v924 = vld [vmem:[#allocation6 + $0x1c] sm:$0xf]
        %v925 = vld [vmem:[%s6] sm:$0x1]
        %v927 = vlaneseq
        %v928 = vshrl.u32 %v927, 7
        %v929 = vsub.s32 0, %v928
        %v930 = vrot.slane %v925, %v929
        %v940 = vunpack.c.l.b16 %v917
        %v941 = vunpack.c.l.b16 %v918
        %v942 = vunpack.c.l.b16 %v919
        %v943 = vunpack.c.l.b16 %v920
        %v944 = vunpack.c.l.b16 %v921
        %v945 = vunpack.c.l.b16 %v922
        %v946 = vunpack.c.l.b16 %v923
        %v947 = vunpack.c.l.b16 %v924
        %v948 = vpack.c.b16 %v941, %v940
        %v949 = vpack.c.b16 %v943, %v942
        %v950 = vpack.c.b16 %v945, %v944
        %v951 = vpack.c.b16 %v947, %v946
        %v957 = vsel %vm508, %v913, 0
        %v960 = vsel %vm508, %v914, 0
        %v963 = vsel %vm508, %v915, 0
        %v966 = vsel %vm508, %v916, 0
        %968 = vmatprep.subr.bf16.mxu0 0
        %969 = vmatpush1.bf16.msra.mxu0 0
        %970 = vmatprep.subr.bf16.mxu0 0
        %971 = vmatpush1.bf16.msra.mxu0 0
        %972 = vmatprep.subr.bf16.mxu0 0
        %973 = vmatpush1.bf16.msra.mxu0 0
        %974 = vmatprep.subr.bf16.mxu0 0
        %975 = vmatpush1.bf16.msra.mxu0 0
        %976 = vmatprep.subr.bf16.mxu0 0
        %977 = vmatpush1.bf16.msra.mxu0 %v951
        %978 = vmatprep.subr.bf16.mxu0 0
        %979 = vmatpush1.bf16.msra.mxu0 %v950
        %980 = vmatprep.subr.bf16.mxu0 0
        %981 = vmatpush1.bf16.msra.mxu0 %v949
        %982 = vmatprep.subr.bf16.mxu0 0
        %983 = vmatpush1.bf16.msra.mxu0 %v948
        %984 = vmatprep.subr.bf16.mxu0 0
        %985 = vmatpush2.bf16.msra.mxu0 0
        %986 = vmatprep.subr.bf16.mxu0 0
        %987 = vmatpush2.bf16.msra.mxu0 0
        %988 = vmatprep.subr.bf16.mxu0 0
        %989 = vmatpush2.bf16.msra.mxu0 0
        %990 = vmatprep.subr.bf16.mxu0 0
        %991 = vmatpush2.bf16.msra.mxu0 0
        %992 = vmatprep.subr.bf16.mxu0 0
        %993 = vmatpush2.bf16.msra.mxu0 0
        %994 = vmatprep.subr.bf16.mxu0 0
        %995 = vmatpush2.bf16.msra.mxu0 0
        %996 = vmatprep.subr.bf16.mxu0 0
        %997 = vmatpush2.bf16.msra.mxu0 0
        %998 = vmatprep.subr.bf16.mxu0 0
        %999 = vmatpush2.bf16.msra.mxu0 0
        %1000 = vmatprep.mubr.bf16.mxu0 0
        %1001 = vmatmul.mubr.bf16.gmra.mxu0 %v957
        %v1002 = vpop.f32.mrf.mxu0
        %v1003 = vadd.f32 %v930, %v1002
        %v1004 = vpop.f32.mrf.mxu0
        %v1005 = vpop.f32.mrf.mxu0
        %v1006 = vadd.f32 %v930, %v1005
        %v1007 = vpop.f32.mrf.mxu0
        %1008 = vmatprep.mubr.bf16.mxu0 0
        %1009 = vmatmul.mubr.bf16.gmra.mxu0 %v960
        %v1010 = vpop.f32.mrf.mxu0
        %v1011 = vadd.f32 %v930, %v1010
        %v1012 = vpop.f32.mrf.mxu0
        %v1013 = vpop.f32.mrf.mxu0
        %v1014 = vadd.f32 %v930, %v1013
        %v1015 = vpop.f32.mrf.mxu0
        %1016 = vmatprep.mubr.bf16.mxu0 0
        %1017 = vmatmul.mubr.bf16.gmra.mxu0 %v963
        %v1018 = vpop.f32.mrf.mxu0
        %v1019 = vadd.f32 %v930, %v1018
        %v1020 = vpop.f32.mrf.mxu0
        %v1021 = vpop.f32.mrf.mxu0
        %v1022 = vadd.f32 %v930, %v1021
        %v1023 = vpop.f32.mrf.mxu0
        %1024 = vmatprep.mubr.bf16.mxu0 0
        %1025 = vmatmul.mubr.bf16.gmra.mxu0 %v966
        %v1026 = vpop.f32.mrf.mxu0
        %v1027 = vadd.f32 %v930, %v1026
        %v1028 = vpop.f32.mrf.mxu0
        %v1029 = vpop.f32.mrf.mxu0
        %v1030 = vadd.f32 %v930, %v1029
        %v1031 = vpop.f32.mrf.mxu0
        %1032 = vdwg.mxu0
        %v1033 = vunpack.c.l.bf16 %v315
        %v1034 = vunpack.c.l.bf16 %v316
        %v1035 = vunpack.c.l.bf16 %v317
        %v1036 = vunpack.c.l.bf16 %v318
        %v1037 = vunpack.c.l.bf16 %v319
        %v1038 = vunpack.c.l.bf16 %v320
        %v1039 = vunpack.c.l.bf16 %v321
        %v1040 = vunpack.c.l.bf16 %v322
        %v1041 = vadd.f32 %v1003, %v1033
        %v1042 = vadd.f32 %v1006, %v1034
        %v1043 = vadd.f32 %v1011, %v1035
        %v1044 = vadd.f32 %v1014, %v1036
        %v1045 = vadd.f32 %v1019, %v1037
        %v1046 = vadd.f32 %v1022, %v1038
        %v1047 = vadd.f32 %v1027, %v1039
        %v1048 = vadd.f32 %v1030, %v1040
        %v1049 = vmax.f32 %v1041, 0.0
        %v1050 = vmax.f32 %v1042, 0.0
        %v1051 = vmax.f32 %v1043, 0.0
        %v1052 = vmax.f32 %v1044, 0.0
        %v1053 = vmax.f32 %v1045, 0.0
        %v1054 = vmax.f32 %v1046, 0.0
        %v1055 = vmax.f32 %v1047, 0.0
        %v1056 = vmax.f32 %v1048, 0.0
        %1057 = vst [vmem:[%s311] sm:$0xff] %v1049
        %1058 = vst [vmem:[%s311 + $0x8] sm:$0xff] %v1050
        %1059 = vst [vmem:[%s311 + $0x10] sm:$0xff] %v1051
        %1060 = vst [vmem:[%s311 + $0x18] sm:$0xff] %v1052
        %1061 = vst [vmem:[%s311 + $0x20] sm:$0xff] %v1053
        %1062 = vst [vmem:[%s311 + $0x28] sm:$0xff] %v1054
        %1063 = vst [vmem:[%s311 + $0x30] sm:$0xff] %v1055
        %1064 = vst [vmem:[%s311 + $0x38] sm:$0xff] %v1056
        %s1065 = sand.u32 %s185, 1
        %s1066 = scalar_lea.sflag [#allocation5], %s1065
        %s1067 = sand.u32 %s185, 1
        %s1068 = smul.addr %s1067, 64
        %s1069 = scalar_lea.vmem [#allocation8], %s1068
        // Predicated region
        $region57: #{tpu_custom_call.1} parent=47 // pred_check
          %p1070 = pneg %p195
        $region58: #{tpu_custom_call.1} parent=47 // pred_check_branch
          %1072 = sbr.rel (%p1070) target = $region60
        $region59: #{tpu_custom_call.1} parent=47 // pred_region
          %s1073 = smul.u32 8, %s25
          %s1075 = ssub.s32 1024, 1024
          %1076 = vsyncadd %s1066, %s1075
          %s1077 = smul.addr %s1073, 128
          %s1078 = scalar_lea.hbm %s7, %s1077
          %s1079 = sshll.u32 %s1069, 4
          %s1080 = int_to_ptr.vmem [resolvable:$true] %s1079
          %1085 = dma.vmem_to_hbm [thread:$0]  %s1080, 1024, %s1078, %s1066, 128, 128, 8
        $region60: #{tpu_custom_call.1} parent=47 // pred_fallthru
          _
      $region48: #{tpu_custom_call.1} parent=5 // pred_fallthru
        _
      %p1086 = scmp.le.s32.totalorder 2, %s20
      // Predicated region
      $region61: #{tpu_custom_call.1} parent=5 // pred_check
        %p1087 = pneg %p1086
      $region62: #{tpu_custom_call.1} parent=5 // pred_check_branch
        %1089 = sbr.rel (%p1087) target = $region64
      $region63: #{tpu_custom_call.1} parent=5 // pred_region
        %s1090 = ssub.s32 %s20, 2
        // Predicated region
        $region65: #{tpu_custom_call.1} parent=63 // pred_check
          %p1091 = pneg %p201
        $region66: #{tpu_custom_call.1} parent=63 // pred_check_branch
          %1093 = sbr.rel (%p1091) target = $region68
        $region67: #{tpu_custom_call.1} parent=63 // pred_region
          %s1094 = sand.u32 %s186, 1
          %s1095 = scalar_lea.sflag [#allocation5], %s1094
          %s1096 = sand.u32 %s186, 1
          %s1097 = smul.addr %s1096, 64
          %s1098 = scalar_lea.vmem [#allocation8], %s1097
          %1099 = dma.done %s1095, 1024
        $region68: #{tpu_custom_call.1} parent=63 // pred_fallthru
          _
      $region64: #{tpu_custom_call.1} parent=5 // pred_fallthru
        _
    $region6: #{tpu_custom_call.1} parent=1 // loop_footer
      %s24 = sadd.s32 1, %s20
    $region7: #{tpu_custom_call.1} parent=1 // loop_footer_branch
      %19 = sbr.rel target = $region3
    $region8: #{tpu_custom_call.1} parent=1 // loop_exit
      _
    %1100 = vsyncpa [#allocation4], 1
    %s1101 = scalar_lea.sflag [#allocation4], 1
    %1102 = vsyncpa %s1101, 1
    %1103 = vsyncpa [#allocation7], 1
    %1104 = vsyncpa [#allocation5], 1
    %s1105 = scalar_lea.sflag [#allocation5], 1
    %1106 = vsyncpa %s1105, 1

</llo_original>
